<compile_context>
chip_gen: v6e
topology: v6e:2x2x1
jax: 0.10.0
libtpu: 0.0.40
codegen_flags: <defaults>
</compile_context>

<pallas_src>
import functools
import math

import jax
import jax.numpy as jnp
from jax import lax
from jax.experimental import pallas as pl
from jax.experimental.pallas import tpu as pltpu


def _attention_kernel(xq_ref, xk_ref, wq_ref, wk_ref, wv_ref,
                      bq_ref, bk_ref, bv_ref, o_ref,
                      q_scr, k_cache, v_cache, m_scr, l_scr, acc_scr,
                      *, scale, k_tile, compute_dtype):
    qi = pl.program_id(1)
    ki = pl.program_id(2)
    off = pl.multiple_of(ki * k_tile, k_tile)

    @pl.when(qi == 0)
    def _fill_kv_cache():
        # Project this k-tile's keys/values once per batch; cache in VMEM so
        # every later q tile reuses them (no redundant MXU work / HBM reads).
        xk = xk_ref[0].astype(compute_dtype)
        k = jnp.dot(xk, wk_ref[...], preferred_element_type=jnp.float32) + bk_ref[...]
        v = jnp.dot(xk, wv_ref[...], preferred_element_type=jnp.float32) + bv_ref[...]
        k_cache[pl.ds(off, k_tile), :] = k.astype(compute_dtype)
        v_cache[pl.ds(off, k_tile), :] = v.astype(compute_dtype)

    @pl.when(ki == 0)
    def _project_q_and_init():
        # Project the q tile once per (b, qi); keep it resident across k tiles.
        xq = xq_ref[0].astype(compute_dtype)
        q = jnp.dot(xq, wq_ref[...], preferred_element_type=jnp.float32) + bq_ref[...]
        # Scale fused into q (T*d muls, not T^2); stored in compute_dtype so
        # no per-k-step cast is needed.
        q_scr[...] = (q * scale).astype(compute_dtype)
        m_scr[...] = jnp.full_like(m_scr, -jnp.inf)
        l_scr[...] = jnp.zeros_like(l_scr)
        acc_scr[...] = jnp.zeros_like(acc_scr)

    k = k_cache[pl.ds(off, k_tile), :]
    v = v_cache[pl.ds(off, k_tile), :]

    # (Tq, Tk) scores: contract the feature axes directly (canonical NT flash
    # lowering; no explicit k transpose materialized per step).
    s = lax.dot_general(q_scr[...], k,
                        dimension_numbers=(((1,), (1,)), ((), ())),
                        preferred_element_type=jnp.float32)

    # Online (flash) softmax update in f32.
    m_prev = m_scr[...]
    m_new = jnp.maximum(m_prev, jnp.max(s, axis=-1, keepdims=True))
    alpha = jnp.exp(m_prev - m_new)
    p = jnp.exp(s - m_new)
    l_scr[...] = alpha * l_scr[...] + jnp.sum(p, axis=-1, keepdims=True)
    acc_scr[...] = alpha * acc_scr[...] + jnp.dot(
        p.astype(compute_dtype), v, preferred_element_type=jnp.float32)
    m_scr[...] = m_new

    @pl.when(ki == pl.num_programs(2) - 1)
    def _finalize():
        # Normalize the (Tq, d_out) context once; exact reciprocal for parity
        # with the reference.
        inv_l = pl.reciprocal(l_scr[...], approx=False)
        o_ref[0] = (acc_scr[...] * inv_l).astype(o_ref.dtype)


def self_attention(x, wq, wk, wv, bq, bk, bv, *,
                   q_tile=256, k_tile=256, compute_dtype=jnp.bfloat16):
    B, T, d_in = x.shape
    d_out = wq.shape[1]
    tq = min(q_tile, T)
    tk = min(k_tile, T)
    assert T % tq == 0 and T % tk == 0, "T must be a multiple of the tile sizes"
    nq, nk = T // tq, T // tk

    cdt = jnp.dtype(compute_dtype)
    cache_bytes = 2 * T * d_out * cdt.itemsize
    assert cache_bytes <= 24 * 1024 * 1024, (
        "K/V VMEM caches too large for this fused schedule; use a two-pass "
        "variant (project K/V to HBM first).")

    # Weights moved once per kernel in compute precision (bf16 halves the DMA
    # and feeds the MXU natively); biases stay f32 for the f32 accumulate-add.
    wq_c = wq.astype(compute_dtype)
    wk_c = wk.astype(compute_dtype)
    wv_c = wv.astype(compute_dtype)
    bq2 = bq.reshape(1, d_out).astype(jnp.float32)
    bk2 = bk.reshape(1, d_out).astype(jnp.float32)
    bv2 = bv.reshape(1, d_out).astype(jnp.float32)

    scale = 1.0 / math.sqrt(d_out)
    kernel = functools.partial(_attention_kernel, scale=scale, k_tile=tk,
                               compute_dtype=compute_dtype)

    grid = (B, nq, nk)

    def xq_index_map(b, qi, ki):
        return (b, qi, 0)

    def xk_index_map(b, qi, ki):
        # Fetch the K-side x tile only while filling the K/V cache (qi == 0);
        # afterwards pin the block index so the pipeline skips the re-DMA.
        first_pass = 1 - jnp.minimum(qi, 1)      # 1 iff qi == 0
        return (b, ki * first_pass, 0)

    xq_spec = pl.BlockSpec((1, tq, d_in), xq_index_map)
    xk_spec = pl.BlockSpec((1, tk, d_in), xk_index_map)
    w_spec = pl.BlockSpec((d_in, d_out), lambda b, qi, ki: (0, 0))
    b_spec = pl.BlockSpec((1, d_out), lambda b, qi, ki: (0, 0))
    o_spec = pl.BlockSpec((1, tq, d_out), lambda b, qi, ki: (b, qi, 0))

    x_itemsize = jnp.dtype(x.dtype).itemsize
    cost = pl.CostEstimate(
        flops=int(2 * B * T * d_in * d_out * 3        # Q/K/V projections (once)
                  + 2 * B * T * T * d_out * 2),       # QK^T and PV
        transcendentals=int(B * T * T),
        bytes_accessed=int(2 * B * T * d_in * x_itemsize
                           + (wq.size + wk.size + wv.size) * cdt.itemsize
                           + (bq.size + bk.size + bv.size) * 4
                           + B * T * d_out * x_itemsize),
    )

    return pl.pallas_call(
        kernel,
        out_shape=jax.ShapeDtypeStruct((B, T, d_out), x.dtype),
        grid_spec=pltpu.PrefetchScalarGridSpec(
            num_scalar_prefetch=0,
            grid=grid,
            in_specs=[xq_spec, xk_spec, w_spec, w_spec, w_spec,
                      b_spec, b_spec, b_spec],
            out_specs=o_spec,
            scratch_shapes=[
                pltpu.VMEM((tq, d_out), compute_dtype),   # scaled q tile
                pltpu.VMEM((T, d_out), compute_dtype),    # K cache (whole seq)
                pltpu.VMEM((T, d_out), compute_dtype),    # V cache (whole seq)
                pltpu.VMEM((tq, 1), jnp.float32),         # running row max
                pltpu.VMEM((tq, 1), jnp.float32),         # running softmax denom
                pltpu.VMEM((tq, d_out), jnp.float32),     # unnormalized context
            ],
        ),
        compiler_params=pltpu.CompilerParams(
            # qi must be 'arbitrary': the K/V cache filled at qi == 0 is reused
            # by later q tiles on the same core.  ki is the reduction axis.
            dimension_semantics=("parallel", "arbitrary", "arbitrary"),
            vmem_limit_bytes=48 * 1024 * 1024,
        ),
        cost_estimate=cost,
    )(x, x, wq_c, wk_c, wv_c, bq2, bk2, bv2)


def reference_self_attention(x, wq, wk, wv, bq, bk, bv):
    q = x @ wq + bq
    k = x @ wk + bk
    v = x @ wv + bv
    scores = jnp.einsum("btd,bsd->bts", q, k) / jnp.sqrt(jnp.float32(k.shape[-1]))
    w = jax.nn.softmax(scores, axis=-1)
    return jnp.einsum("bts,bsd->btd", w, v)


def _make_inputs(key, B, T, d_in, d_out):
    kx, kq, kk, kv, kbq, kbk, kbv = jax.random.split(key, 7)
    x = jax.random.normal(kx, (B, T, d_in), dtype=jnp.float32)
    wq = jax.random.normal(kq, (d_in, d_out), dtype=jnp.float32) * 0.1
    wk = jax.random.normal(kk, (d_in, d_out), dtype=jnp.float32) * 0.1
    wv = jax.random.normal(kv, (d_in, d_out), dtype=jnp.float32) * 0.1
    bq = jax.random.normal(kbq, (d_out,), dtype=jnp.float32) * 0.1
    bk = jax.random.normal(kbk, (d_out,), dtype=jnp.float32) * 0.1
    bv = jax.random.normal(kbv, (d_out,), dtype=jnp.float32) * 0.1
    return x, wq, wk, wv, bq, bk, bv


if __name__ == "__main__":
    key = jax.random.PRNGKey(0)
    k1, k2, k3 = jax.random.split(key, 3)

    # Test 1: module-spec shapes (batch=2, seq=8, d=32), exact f32 MXU path.
    args = _make_inputs(k1, 2, 8, 32, 32)
    out = jax.block_until_ready(self_attention(*args, compute_dtype=jnp.float32))
    ref = reference_self_attention(*args)
    assert out.shape == ref.shape
    assert jnp.allclose(out, ref, atol=1e-4, rtol=1e-4), "mismatch (small, f32)"

    # Test 2: multi-tile grid (2, 2, 2) with 256-wide tiles, default bf16 MXU
    # inputs + f32 accumulation (online softmax across ki, cache reuse at qi=1).
    args = _make_inputs(k2, 2, 512, 128, 128)
    out = jax.block_until_ready(self_attention(*args))
    ref = reference_self_attention(*args)
    assert out.shape == ref.shape
    assert jnp.allclose(out, ref, atol=5e-2, rtol=5e-2), "mismatch (tiled, bf16)"

    # Test 3: 128-wide tiles, grid (2, 3, 3) -> exercises multi-tile K/V cache
    # fill and its reuse for qi > 0.
    args = _make_inputs(k3, 2, 384, 128, 128)
    out = jax.block_until_ready(self_attention(*args, q_tile=128, k_tile=128))
    ref = reference_self_attention(*args)
    assert out.shape == ref.shape
    assert jnp.allclose(out, ref, atol=5e-2, rtol=5e-2), "mismatch (128 tiles, bf16)"

    print("KERNEL_OK")
</pallas_src>

<mosaic_0001>
module attributes {stable_mosaic.version = 11 : i64} {
  func.func @_attention_kernel(%arg0: i32, %arg1: i32, %arg2: i32, %arg3: memref<1x8x32xf32, #tpu.memory_space<vmem>>, %arg4: memref<1x8x32xf32, #tpu.memory_space<vmem>>, %arg5: memref<32x32xf32, #tpu.memory_space<vmem>>, %arg6: memref<32x32xf32, #tpu.memory_space<vmem>>, %arg7: memref<32x32xf32, #tpu.memory_space<vmem>>, %arg8: memref<1x32xf32, #tpu.memory_space<vmem>>, %arg9: memref<1x32xf32, #tpu.memory_space<vmem>>, %arg10: memref<1x32xf32, #tpu.memory_space<vmem>>, %arg11: memref<1x8x32xf32, #tpu.memory_space<vmem>>, %arg12: memref<8x32xf32, #tpu.memory_space<vmem>>, %arg13: memref<8x32xf32, #tpu.memory_space<vmem>>, %arg14: memref<8x32xf32, #tpu.memory_space<vmem>>, %arg15: memref<8x1xf32, #tpu.memory_space<vmem>>, %arg16: memref<8x1xf32, #tpu.memory_space<vmem>>, %arg17: memref<8x32xf32, #tpu.memory_space<vmem>>) attributes {dimension_semantics = [#tpu.dimension_semantics<parallel>, #tpu.dimension_semantics<arbitrary>, #tpu.dimension_semantics<arbitrary>], iteration_bounds = array<i64: 2, 1, 1>, scalar_prefetch = 0 : i64, scratch_operands = 6 : i64, tpu.core_type = #tpu.core_type<tc>, window_params = [{transform_indices = @transform_0, window_bounds = array<i64: 1, 8, 32>}, {transform_indices = @transform_1, window_bounds = array<i64: 1, 8, 32>}, {pipeline_mode = #tpu.pipeline_mode<synchronous>, transform_indices = @transform_2, window_bounds = array<i64: 32, 32>}, {pipeline_mode = #tpu.pipeline_mode<synchronous>, transform_indices = @transform_3, window_bounds = array<i64: 32, 32>}, {pipeline_mode = #tpu.pipeline_mode<synchronous>, transform_indices = @transform_4, window_bounds = array<i64: 32, 32>}, {pipeline_mode = #tpu.pipeline_mode<synchronous>, transform_indices = @transform_5, window_bounds = array<i64: 1, 32>}, {pipeline_mode = #tpu.pipeline_mode<synchronous>, transform_indices = @transform_6, window_bounds = array<i64: 1, 32>}, {pipeline_mode = #tpu.pipeline_mode<synchronous>, transform_indices = @transform_7, window_bounds = array<i64: 1, 32>}, {transform_indices = @transform_8, window_bounds = array<i64: 1, 8, 32>}]} {
    %c8_i32 = arith.constant 8 : i32
    %0 = arith.muli %arg2, %c8_i32 : i32
    %1 = tpu.assume_multiple %0, 8 : i32
    %c0_i32 = arith.constant 0 : i32
    %2 = arith.cmpi eq, %arg1, %c0_i32 : i32
    %3 = arith.extui %2 : i1 to i32
    %c0_i32_0 = arith.constant 0 : i32
    %4 = arith.cmpi ne, %3, %c0_i32_0 : i32
    scf.if %4 {
      %c0_23 = arith.constant 0 : index
      %c0_24 = arith.constant 0 : index
      %c0_25 = arith.constant 0 : index
      %39 = vector.load %arg4[%c0_23, %c0_24, %c0_25] : memref<1x8x32xf32, #tpu.memory_space<vmem>>, vector<1x8x32xf32>
      %40 = vector.shape_cast %39 : vector<1x8x32xf32> to vector<8x32xf32>
      %c0_26 = arith.constant 0 : index
      %c0_27 = arith.constant 0 : index
      %41 = vector.load %arg6[%c0_26, %c0_27] : memref<32x32xf32, #tpu.memory_space<vmem>>, vector<32x32xf32>
      %cst_28 = arith.constant dense<0.000000e+00> : vector<8x32xf32>
      %42 = tpu.matmul %40, %41, %cst_28 {dimension_numbers = #tpu.dot_dimension_numbers<[1], [0], [0], [1], [0, 0, 1, 1], [], []>} : vector<8x32xf32>, vector<32x32xf32>, vector<8x32xf32> -> vector<8x32xf32>
      %c0_29 = arith.constant 0 : index
      %c0_30 = arith.constant 0 : index
      %43 = vector.load %arg9[%c0_29, %c0_30] : memref<1x32xf32, #tpu.memory_space<vmem>>, vector<1x32xf32>
      %44 = vector.broadcast %43 : vector<1x32xf32> to vector<8x32xf32>
      %45 = arith.addf %42, %44 : vector<8x32xf32>
      %c0_31 = arith.constant 0 : index
      %c0_32 = arith.constant 0 : index
      %46 = vector.load %arg7[%c0_31, %c0_32] : memref<32x32xf32, #tpu.memory_space<vmem>>, vector<32x32xf32>
      %cst_33 = arith.constant dense<0.000000e+00> : vector<8x32xf32>
      %47 = tpu.matmul %40, %46, %cst_33 {dimension_numbers = #tpu.dot_dimension_numbers<[1], [0], [0], [1], [0, 0, 1, 1], [], []>} : vector<8x32xf32>, vector<32x32xf32>, vector<8x32xf32> -> vector<8x32xf32>
      %c0_34 = arith.constant 0 : index
      %c0_35 = arith.constant 0 : index
      %48 = vector.load %arg10[%c0_34, %c0_35] : memref<1x32xf32, #tpu.memory_space<vmem>>, vector<1x32xf32>
      %49 = vector.broadcast %48 : vector<1x32xf32> to vector<8x32xf32>
      %50 = arith.addf %47, %49 : vector<8x32xf32>
      %51 = arith.index_cast %1 : i32 to index
      %c0_36 = arith.constant 0 : index
      %52 = vector.load %arg13[%51, %c0_36] : memref<8x32xf32, #tpu.memory_space<vmem>>, vector<8x32xf32>
      tpu.vector_store %arg13[%51, %c0_36], %45 {strides = array<i32>} : memref<8x32xf32, #tpu.memory_space<vmem>>, vector<8x32xf32>,
      %53 = arith.index_cast %1 : i32 to index
      %c0_37 = arith.constant 0 : index
      %54 = vector.load %arg14[%53, %c0_37] : memref<8x32xf32, #tpu.memory_space<vmem>>, vector<8x32xf32>
      tpu.vector_store %arg14[%53, %c0_37], %50 {strides = array<i32>} : memref<8x32xf32, #tpu.memory_space<vmem>>, vector<8x32xf32>,
    } else {
    }
    %c0_i32_1 = arith.constant 0 : i32
    %5 = arith.cmpi eq, %arg2, %c0_i32_1 : i32
    %6 = arith.extui %5 : i1 to i32
    %c0_i32_2 = arith.constant 0 : i32
    %7 = arith.cmpi ne, %6, %c0_i32_2 : i32
    scf.if %7 {
      %c0_23 = arith.constant 0 : index
      %c0_24 = arith.constant 0 : index
      %c0_25 = arith.constant 0 : index
      %39 = vector.load %arg3[%c0_23, %c0_24, %c0_25] : memref<1x8x32xf32, #tpu.memory_space<vmem>>, vector<1x8x32xf32>
      %40 = vector.shape_cast %39 : vector<1x8x32xf32> to vector<8x32xf32>
      %c0_26 = arith.constant 0 : index
      %c0_27 = arith.constant 0 : index
      %41 = vector.load %arg5[%c0_26, %c0_27] : memref<32x32xf32, #tpu.memory_space<vmem>>, vector<32x32xf32>
      %cst_28 = arith.constant dense<0.000000e+00> : vector<8x32xf32>
      %42 = tpu.matmul %40, %41, %cst_28 {dimension_numbers = #tpu.dot_dimension_numbers<[1], [0], [0], [1], [0, 0, 1, 1], [], []>} : vector<8x32xf32>, vector<32x32xf32>, vector<8x32xf32> -> vector<8x32xf32>
      %c0_29 = arith.constant 0 : index
      %c0_30 = arith.constant 0 : index
      %43 = vector.load %arg8[%c0_29, %c0_30] : memref<1x32xf32, #tpu.memory_space<vmem>>, vector<1x32xf32>
      %44 = vector.broadcast %43 : vector<1x32xf32> to vector<8x32xf32>
      %45 = arith.addf %42, %44 : vector<8x32xf32>
      %cst_31 = arith.constant 0.176776692 : f32
      %46 = vector.broadcast %cst_31 : f32 to vector<8x32xf32>
      %47 = arith.mulf %45, %46 : vector<8x32xf32>
      %c0_32 = arith.constant 0 : index
      %c0_33 = arith.constant 0 : index
      %48 = vector.load %arg12[%c0_32, %c0_33] : memref<8x32xf32, #tpu.memory_space<vmem>>, vector<8x32xf32>
      tpu.vector_store %arg12[%c0_32, %c0_33], %47 {strides = array<i32>} : memref<8x32xf32, #tpu.memory_space<vmem>>, vector<8x32xf32>,
      %cst_34 = arith.constant 0xFF800000 : f32
      %49 = vector.broadcast %cst_34 : f32 to vector<8x1xf32>
      %c0_35 = arith.constant 0 : index
      %c0_36 = arith.constant 0 : index
      %50 = vector.load %arg15[%c0_35, %c0_36] : memref<8x1xf32, #tpu.memory_space<vmem>>, vector<8x1xf32>
      tpu.vector_store %arg15[%c0_35, %c0_36], %49 {strides = array<i32>} : memref<8x1xf32, #tpu.memory_space<vmem>>, vector<8x1xf32>,
      %cst_37 = arith.constant 0.000000e+00 : f32
      %51 = vector.broadcast %cst_37 : f32 to vector<8x1xf32>
      %c0_38 = arith.constant 0 : index
      %c0_39 = arith.constant 0 : index
      %52 = vector.load %arg16[%c0_38, %c0_39] : memref<8x1xf32, #tpu.memory_space<vmem>>, vector<8x1xf32>
      tpu.vector_store %arg16[%c0_38, %c0_39], %51 {strides = array<i32>} : memref<8x1xf32, #tpu.memory_space<vmem>>, vector<8x1xf32>,
      %cst_40 = arith.constant 0.000000e+00 : f32
      %53 = vector.broadcast %cst_40 : f32 to vector<8x32xf32>
      %c0_41 = arith.constant 0 : index
      %c0_42 = arith.constant 0 : index
      %54 = vector.load %arg17[%c0_41, %c0_42] : memref<8x32xf32, #tpu.memory_space<vmem>>, vector<8x32xf32>
      tpu.vector_store %arg17[%c0_41, %c0_42], %53 {strides = array<i32>} : memref<8x32xf32, #tpu.memory_space<vmem>>, vector<8x32xf32>,
    } else {
    }
    %8 = arith.index_cast %1 : i32 to index
    %c0 = arith.constant 0 : index
    %9 = vector.load %arg13[%8, %c0] : memref<8x32xf32, #tpu.memory_space<vmem>>, vector<8x32xf32>
    %10 = arith.index_cast %1 : i32 to index
    %c0_3 = arith.constant 0 : index
    %11 = vector.load %arg14[%10, %c0_3] : memref<8x32xf32, #tpu.memory_space<vmem>>, vector<8x32xf32>
    %c0_4 = arith.constant 0 : index
    %c0_5 = arith.constant 0 : index
    %12 = vector.load %arg12[%c0_4, %c0_5] : memref<8x32xf32, #tpu.memory_space<vmem>>, vector<8x32xf32>
    %cst = arith.constant dense<0.000000e+00> : vector<8x8xf32>
    %13 = tpu.matmul %12, %9, %cst {dimension_numbers = #tpu.dot_dimension_numbers<[1], [1], [0], [0], [0, 0, 1, 0], [], []>} : vector<8x32xf32>, vector<8x32xf32>, vector<8x8xf32> -> vector<8x8xf32>
    %c0_6 = arith.constant 0 : index
    %c0_7 = arith.constant 0 : index
    %14 = vector.load %arg15[%c0_6, %c0_7] : memref<8x1xf32, #tpu.memory_space<vmem>>, vector<8x1xf32>
    %cst_8 = arith.constant dense<0xFF800000> : vector<8xf32>
    %15 = vector.multi_reduction <maximumf>, %13, %cst_8 [1] : vector<8x8xf32> to vector<8xf32>
    %16 = vector.shape_cast %15 : vector<8xf32> to vector<8x1xf32>
    %17 = arith.maximumf %14, %16 : vector<8x1xf32>
    %18 = arith.subf %14, %17 : vector<8x1xf32>
    %19 = math.exp %18 : vector<8x1xf32>
    %20 = vector.broadcast %17 : vector<8x1xf32> to vector<8x8xf32>
    %21 = arith.subf %13, %20 : vector<8x8xf32>
    %22 = math.exp %21 : vector<8x8xf32>
    %c0_9 = arith.constant 0 : index
    %c0_10 = arith.constant 0 : index
    %23 = vector.load %arg16[%c0_9, %c0_10] : memref<8x1xf32, #tpu.memory_space<vmem>>, vector<8x1xf32>
    %24 = arith.mulf %19, %23 : vector<8x1xf32>
    %cst_11 = arith.constant dense<0.000000e+00> : vector<8xf32>
    %25 = vector.multi_reduction <add>, %22, %cst_11 [1] : vector<8x8xf32> to vector<8xf32>
    %26 = vector.shape_cast %25 : vector<8xf32> to vector<8x1xf32>
    %27 = arith.addf %24, %26 : vector<8x1xf32>
    %c0_12 = arith.constant 0 : index
    %c0_13 = arith.constant 0 : index
    %28 = vector.load %arg16[%c0_12, %c0_13] : memref<8x1xf32, #tpu.memory_space<vmem>>, vector<8x1xf32>
    tpu.vector_store %arg16[%c0_12, %c0_13], %27 {strides = array<i32>} : memref<8x1xf32, #tpu.memory_space<vmem>>, vector<8x1xf32>,
    %c0_14 = arith.constant 0 : index
    %c0_15 = arith.constant 0 : index
    %29 = vector.load %arg17[%c0_14, %c0_15] : memref<8x32xf32, #tpu.memory_space<vmem>>, vector<8x32xf32>
    %30 = vector.broadcast %19 : vector<8x1xf32> to vector<8x32xf32>
    %31 = arith.mulf %30, %29 : vector<8x32xf32>
    %cst_16 = arith.constant dense<0.000000e+00> : vector<8x32xf32>
    %32 = tpu.matmul %22, %11, %cst_16 {dimension_numbers = #tpu.dot_dimension_numbers<[1], [0], [0], [1], [0, 0, 1, 1], [], []>} : vector<8x8xf32>, vector<8x32xf32>, vector<8x32xf32> -> vector<8x32xf32>
    %33 = arith.addf %31, %32 : vector<8x32xf32>
    %c0_17 = arith.constant 0 : index
    %c0_18 = arith.constant 0 : index
    %34 = vector.load %arg17[%c0_17, %c0_18] : memref<8x32xf32, #tpu.memory_space<vmem>>, vector<8x32xf32>
    tpu.vector_store %arg17[%c0_17, %c0_18], %33 {strides = array<i32>} : memref<8x32xf32, #tpu.memory_space<vmem>>, vector<8x32xf32>,
    %c0_19 = arith.constant 0 : index
    %c0_20 = arith.constant 0 : index
    %35 = vector.load %arg15[%c0_19, %c0_20] : memref<8x1xf32, #tpu.memory_space<vmem>>, vector<8x1xf32>
    tpu.vector_store %arg15[%c0_19, %c0_20], %17 {strides = array<i32>} : memref<8x1xf32, #tpu.memory_space<vmem>>, vector<8x1xf32>,
    %c0_i32_21 = arith.constant 0 : i32
    %36 = arith.cmpi eq, %arg2, %c0_i32_21 : i32
    %37 = arith.extui %36 : i1 to i32
    %c0_i32_22 = arith.constant 0 : i32
    %38 = arith.cmpi ne, %37, %c0_i32_22 : i32
    scf.if %38 {
      %c0_23 = arith.constant 0 : index
      %c0_24 = arith.constant 0 : index
      %39 = vector.load %arg16[%c0_23, %c0_24] : memref<8x1xf32, #tpu.memory_space<vmem>>, vector<8x1xf32>
      %40 = tpu.reciprocal %39 : vector<8x1xf32> -> vector<8x1xf32>
      %c0_25 = arith.constant 0 : index
      %c0_26 = arith.constant 0 : index
      %41 = vector.load %arg17[%c0_25, %c0_26] : memref<8x32xf32, #tpu.memory_space<vmem>>, vector<8x32xf32>
      %42 = vector.broadcast %40 : vector<8x1xf32> to vector<8x32xf32>
      %43 = arith.mulf %41, %42 : vector<8x32xf32>
      %c0_27 = arith.constant 0 : index
      %c0_28 = arith.constant 0 : index
      %c0_29 = arith.constant 0 : index
      %44 = vector.load %arg11[%c0_27, %c0_28, %c0_29] : memref<1x8x32xf32, #tpu.memory_space<vmem>>, vector<1x8x32xf32>
      %45 = vector.shape_cast %44 : vector<1x8x32xf32> to vector<8x32xf32>
      %46 = vector.shape_cast %43 : vector<8x32xf32> to vector<1x8x32xf32>
      tpu.vector_store %arg11[%c0_27, %c0_28, %c0_29], %46 {strides = array<i32>} : memref<1x8x32xf32, #tpu.memory_space<vmem>>, vector<1x8x32xf32>,
    } else {
    }
    return
  }
  func.func @transform_0(%arg0: i32, %arg1: i32, %arg2: i32) -> (i32, i32, i32) {
    %c0_i32 = arith.constant 0 : i32
    %c0_i32_0 = arith.constant 0 : i32
    return %arg0, %arg1, %c0_i32 : i32, i32, i32
  }
  func.func @transform_1(%arg0: i32, %arg1: i32, %arg2: i32) -> (i32, i32, i32) {
    %c1_i32 = arith.constant 1 : i32
    %0 = arith.minsi %arg1, %c1_i32 : i32
    %c1_i32_0 = arith.constant 1 : i32
    %1 = arith.subi %c1_i32_0, %0 : i32
    %2 = arith.muli %arg2, %1 : i32
    %c0_i32 = arith.constant 0 : i32
    %c0_i32_1 = arith.constant 0 : i32
    return %arg0, %2, %c0_i32 : i32, i32, i32
  }
  func.func @transform_2(%arg0: i32, %arg1: i32, %arg2: i32) -> (i32, i32) {
    %c0_i32 = arith.constant 0 : i32
    %c0_i32_0 = arith.constant 0 : i32
    %c0_i32_1 = arith.constant 0 : i32
    return %c0_i32, %c0_i32_0 : i32, i32
  }
  func.func @transform_3(%arg0: i32, %arg1: i32, %arg2: i32) -> (i32, i32) {
    %c0_i32 = arith.constant 0 : i32
    %c0_i32_0 = arith.constant 0 : i32
    %c0_i32_1 = arith.constant 0 : i32
    return %c0_i32, %c0_i32_0 : i32, i32
  }
  func.func @transform_4(%arg0: i32, %arg1: i32, %arg2: i32) -> (i32, i32) {
    %c0_i32 = arith.constant 0 : i32
    %c0_i32_0 = arith.constant 0 : i32
    %c0_i32_1 = arith.constant 0 : i32
    return %c0_i32, %c0_i32_0 : i32, i32
  }
  func.func @transform_5(%arg0: i32, %arg1: i32, %arg2: i32) -> (i32, i32) {
    %c0_i32 = arith.constant 0 : i32
    %c0_i32_0 = arith.constant 0 : i32
    %c0_i32_1 = arith.constant 0 : i32
    return %c0_i32, %c0_i32_0 : i32, i32
  }
  func.func @transform_6(%arg0: i32, %arg1: i32, %arg2: i32) -> (i32, i32) {
    %c0_i32 = arith.constant 0 : i32
    %c0_i32_0 = arith.constant 0 : i32
    %c0_i32_1 = arith.constant 0 : i32
    return %c0_i32, %c0_i32_0 : i32, i32
  }
  func.func @transform_7(%arg0: i32, %arg1: i32, %arg2: i32) -> (i32, i32) {
    %c0_i32 = arith.constant 0 : i32
    %c0_i32_0 = arith.constant 0 : i32
    %c0_i32_1 = arith.constant 0 : i32
    return %c0_i32, %c0_i32_0 : i32, i32
  }
  func.func @transform_8(%arg0: i32, %arg1: i32, %arg2: i32) -> (i32, i32, i32) {
    %c0_i32 = arith.constant 0 : i32
    %c0_i32_0 = arith.constant 0 : i32
    return %arg0, %arg1, %c0_i32 : i32, i32, i32
  }
}

</mosaic_0001>

<llo_original>
// kernel: tpu_custom_call.1
$region0: #{tpu_custom_call.1}
  #allocation0 [shape = 'u32[]', space=smem, size = 0x4, offset = 0x4, fixed_abs, tag = 'smem constant byte address 0x4 - core index']
  #allocation1 [shape = 'u32[144,128]{1,0:T(1,128)}', space=vmem, size = 0x12000, scoped, tag = 'internal scratch']
  #allocation2 [shape = 'f32[8,32]{1,0:T(8,128)}', space=vmem, size = 0x1000, scoped, tag = 'scratch operand']
  #allocation3 [shape = 'f32[8,32]{1,0:T(8,128)}', space=vmem, size = 0x1000, scoped, tag = 'scratch operand']
  #allocation4 [shape = 'f32[8,32]{1,0:T(8,128)}', space=vmem, size = 0x1000, scoped, tag = 'scratch operand']
  #allocation5 [shape = 'f32[8,1]{1,0:T(8,128)}', space=vmem, size = 0x1000, scoped, tag = 'scratch operand']
  #allocation6 [shape = 'f32[8,1]{1,0:T(8,128)}', space=vmem, size = 0x1000, scoped, tag = 'scratch operand']
  #allocation7 [shape = 'f32[8,32]{1,0:T(8,128)}', space=vmem, size = 0x1000, scoped, tag = 'scratch operand']
  %s0 = inlined_call_operand.hbm [shape: f32[2,8,32], index: 0, kind: input, shape index: {}]
  %s1 = inlined_call_operand.hbm [shape: f32[2,8,32], index: 1, kind: input, shape index: {}]
  %s2 = inlined_call_operand.hbm [shape: f32[32,32], index: 2, kind: input, shape index: {}]
  %s3 = inlined_call_operand.hbm [shape: f32[32,32], index: 3, kind: input, shape index: {}]
  %s4 = inlined_call_operand.hbm [shape: f32[32,32], index: 4, kind: input, shape index: {}]
  %s5 = inlined_call_operand.vmem [shape: f32[1,32], index: 5, kind: input, shape index: {}]
  %s6 = inlined_call_operand.vmem [shape: f32[1,32], index: 6, kind: input, shape index: {}]
  %s7 = inlined_call_operand.vmem [shape: f32[1,32], index: 7, kind: input, shape index: {}]
  %s8 = inlined_call_operand.hbm [shape: f32[2,8,32], index: 8, kind: output, shape index: {}]
  %s9 = sld [smem:[#allocation0]]
  $region97: #{tpu_custom_call.1} parent=0
    _
  %s11 = ssub.s32 1, %s9
  %s12 = scalar_select 0, %s11, %s9
  $region1: #{tpu_custom_call.1} parent=0
    #allocation8 [shape = 'u8[8192]{0}', space=vmem, size = 0x2000, scoped, tag = 'input window, operand 0']
    #allocation9 [shape = 's32[2]{0}', space=sflag, size = 0x8, scoped, tag = 'scoped memory for tpu_custom_call.1']
    #allocation10 [shape = 's32[2]{0}', space=sflag, size = 0x8, scoped, tag = 'scoped memory for tpu_custom_call.1']
    #allocation11 [shape = 'u8[8192]{0}', space=vmem, size = 0x2000, scoped, tag = 'input window, operand 1']
    #allocation12 [shape = 's32[2]{0}', space=sflag, size = 0x8, scoped, tag = 'scoped memory for tpu_custom_call.1']
    #allocation13 [shape = 'u8[16384]{0}', space=vmem, size = 0x4000, scoped, tag = 'input window, operand 2, single buffered']
    #allocation14 [shape = 'u8[16384]{0}', space=vmem, size = 0x4000, scoped, tag = 'input window, operand 3, single buffered']
    #allocation15 [shape = 's32[1]{0}', space=sflag, size = 0x4, scoped, tag = 'scoped memory for tpu_custom_call.1']
    #allocation16 [shape = 'u8[16384]{0}', space=vmem, size = 0x4000, scoped, tag = 'input window, operand 4, single buffered']
    #allocation17 [shape = 'u8[8192]{0}', space=vmem, size = 0x2000, scoped, tag = 'output window, operand 0']
    %13 = vsyncpa [#allocation9], 0
    %s14 = scalar_lea.sflag [#allocation9], 1
    %15 = vsyncpa %s14, 0
    %16 = vsyncpa [#allocation12], 0
    %s17 = scalar_lea.sflag [#allocation12], 1
    %18 = vsyncpa %s17, 0
    %19 = vsyncpa [#allocation15], 0
    %20 = vsyncpa [#allocation10], 0
    %s21 = scalar_lea.sflag [#allocation10], 1
    %22 = vsyncpa %s21, 0
    loop: start=0, step=1, limit=4
    $region2: #{tpu_custom_call.1} parent=1 // loop_pre_header
      _
    $region3: #{tpu_custom_call.1} parent=1 // loop_header
      %s24 = sphi 0, %s28
      %p25 = scmp.ge.s32.totalorder %s24, 4
      %s31 = sphi 0, %s50
      %s32 = sphi 0, %s46
      %s33 = sphi 0, %s42
      %s34 = sphi 0, %s31
      %s35 = sphi 0, %s32
      %s36 = sphi 0, %s33
      %s37 = sphi 0, %s34
      %s38 = sphi 0, %s35
      %s39 = sphi 0, %s36
      %s55 = sphi 0, %s57
      %s58 = sphi 0, %s55
      %s59 = sphi 0, %s58
      %s75 = sphi 0, %s59
      %s91 = sphi 0, %s93
      %s94 = sphi 0, %s91
      %s95 = sphi 0, %s94
      %s111 = sphi 0, %s95
      %s115 = sphi 0, %s115
      %s117 = sphi 0, %s115
      %s118 = sphi 0, %s117
      %s132 = sphi 0, %s118
      %s136 = sphi 0, %s136
      %s138 = sphi 0, %s136
      %s139 = sphi 0, %s138
      %s153 = sphi 0, %s139
      %s157 = sphi 0, %s157
      %s159 = sphi 0, %s157
      %s160 = sphi 0, %s159
      %s174 = sphi 0, %s160
      %s178 = sphi 0, %s178
      %s180 = sphi 0, %s178
      %s181 = sphi 0, %s180
      %s195 = sphi 0, %s181
      %s199 = sphi 0, %s199
      %s201 = sphi 0, %s199
      %s202 = sphi 0, %s201
      %s216 = sphi 0, %s202
      %s220 = sphi 0, %s220
      %s222 = sphi 0, %s220
      %s223 = sphi 0, %s222
      %s237 = sphi 0, %s223
      %s245 = sphi 0, %s247
      %s248 = sphi 0, %s245
      %s249 = sphi 0, %s248
      %s265 = sphi 0, %s249
    $region4: #{tpu_custom_call.1} parent=1 // loop_header_branch
      %27 = sbr.rel (%p25) target = $region8
    $region5: #{tpu_custom_call.1} parent=1 // loop_body
      %s29 = ssub.s32 %s24, 1
      %s30 = ssub.s32 %s24, 2
      %s40 = sadd.s32 1, %s33
      %p41 = scmp.ge.s32.totalorder %s40, 1
      %s42 = scalar_select %p41, 0, %s40
      %s43 = sadd.s32 1, %s32
      %s44 = scalar_select %p41, %s43, %s32
      %p45 = scmp.ge.s32.totalorder %s44, 1
      %s46 = scalar_select %p45, 0, %s44
      %s47 = sadd.s32 1, %s31
      %s48 = scalar_select %p45, %s47, %s31
      %p49 = scmp.ge.s32.totalorder %s48, 2
      %s50 = scalar_select %p49, 0, %s48
      %s51 = ssub.s32 %s31, %s50
      %s52 = ssub.s32 %s32, %s46
      %s53 = sor.u32 %s51, %s52
      %p54 = scmp.eq.s32.totalorder %s53, 0
      %s56 = sadd.s32 %s55, 1
      %s57 = scalar_select %p54, %s55, %s56
      %p60 = pneg %p54
      %p61 = scmp.eq.s32.totalorder %s24, 1
      %p62 = por %p60, %p61
      %p63 = scmp.ne.s32.totalorder %s55, %s58
      %p64 = scmp.eq.s32.totalorder %s24, 0
      %p65 = por %p63, %p64
      %p66 = scmp.ne.s32.totalorder %s55, %s58
      %p67 = scmp.eq.s32.totalorder %s29, 1
      %p68 = por %p66, %p67
      %p69 = scmp.ne.s32.totalorder %s58, %s59
      %p70 = scmp.eq.s32.totalorder %s29, 0
      %p71 = por %p69, %p70
      %p72 = scmp.ne.s32.totalorder %s58, %s59
      %p73 = scmp.eq.s32.totalorder %s30, 1
      %p74 = por %p72, %p73
      %p76 = scmp.ne.s32.totalorder %s59, %s75
      %p77 = scmp.eq.s32.totalorder %s30, 0
      %p78 = por %p76, %p77
      %p79 = scmp.lt.s32.totalorder %s32, 1
      %s80 = scalar_select %p79, %s32, 1
      %s81 = ssub.s32 1, %s80
      %s82 = smul.u32 %s33, %s81
      %p83 = scmp.lt.s32.totalorder %s46, 1
      %s84 = scalar_select %p83, %s46, 1
      %s85 = ssub.s32 1, %s84
      %s86 = smul.u32 %s42, %s85
      %s87 = ssub.s32 %s31, %s50
      %s88 = ssub.s32 %s82, %s86
      %s89 = sor.u32 %s87, %s88
      %p90 = scmp.eq.s32.totalorder %s89, 0
      %s92 = sadd.s32 %s91, 1
      %s93 = scalar_select %p90, %s91, %s92
      %p96 = pneg %p90
      %p97 = scmp.eq.s32.totalorder %s24, 1
      %p98 = por %p96, %p97
      %p99 = scmp.ne.s32.totalorder %s91, %s94
      %p100 = scmp.eq.s32.totalorder %s24, 0
      %p101 = por %p99, %p100
      %p102 = scmp.ne.s32.totalorder %s91, %s94
      %p103 = scmp.eq.s32.totalorder %s29, 1
      %p104 = por %p102, %p103
      %p105 = scmp.ne.s32.totalorder %s94, %s95
      %p106 = scmp.eq.s32.totalorder %s29, 0
      %p107 = por %p105, %p106
      %p108 = scmp.ne.s32.totalorder %s94, %s95
      %p109 = scmp.eq.s32.totalorder %s30, 1
      %p110 = por %p108, %p109
      %p112 = scmp.ne.s32.totalorder %s95, %s111
      %p113 = scmp.eq.s32.totalorder %s30, 0
      %p114 = por %p112, %p113
      %s116 = sadd.s32 %s115, 1
      %p119 = scmp.eq.s32.totalorder %s24, 1
      %p120 = scmp.ne.s32.totalorder %s115, %s117
      %p121 = scmp.eq.s32.totalorder %s24, 0
      %p122 = por %p120, %p121
      %p123 = scmp.ne.s32.totalorder %s115, %s117
      %p124 = scmp.eq.s32.totalorder %s29, 1
      %p125 = por %p123, %p124
      %p126 = scmp.ne.s32.totalorder %s117, %s118
      %p127 = scmp.eq.s32.totalorder %s29, 0
      %p128 = por %p126, %p127
      %p129 = scmp.ne.s32.totalorder %s117, %s118
      %p130 = scmp.eq.s32.totalorder %s30, 1
      %p131 = por %p129, %p130
      %p133 = scmp.ne.s32.totalorder %s118, %s132
      %p134 = scmp.eq.s32.totalorder %s30, 0
      %p135 = por %p133, %p134
      %s137 = sadd.s32 %s136, 1
      %p140 = scmp.eq.s32.totalorder %s24, 1
      %p141 = scmp.ne.s32.totalorder %s136, %s138
      %p142 = scmp.eq.s32.totalorder %s24, 0
      %p143 = por %p141, %p142
      %p144 = scmp.ne.s32.totalorder %s136, %s138
      %p145 = scmp.eq.s32.totalorder %s29, 1
      %p146 = por %p144, %p145
      %p147 = scmp.ne.s32.totalorder %s138, %s139
      %p148 = scmp.eq.s32.totalorder %s29, 0
      %p149 = por %p147, %p148
      %p150 = scmp.ne.s32.totalorder %s138, %s139
      %p151 = scmp.eq.s32.totalorder %s30, 1
      %p152 = por %p150, %p151
      %p154 = scmp.ne.s32.totalorder %s139, %s153
      %p155 = scmp.eq.s32.totalorder %s30, 0
      %p156 = por %p154, %p155
      %s158 = sadd.s32 %s157, 1
      %p161 = scmp.eq.s32.totalorder %s24, 1
      %p162 = scmp.ne.s32.totalorder %s157, %s159
      %p163 = scmp.eq.s32.totalorder %s24, 0
      %p164 = por %p162, %p163
      %p165 = scmp.ne.s32.totalorder %s157, %s159
      %p166 = scmp.eq.s32.totalorder %s29, 1
      %p167 = por %p165, %p166
      %p168 = scmp.ne.s32.totalorder %s159, %s160
      %p169 = scmp.eq.s32.totalorder %s29, 0
      %p170 = por %p168, %p169
      %p171 = scmp.ne.s32.totalorder %s159, %s160
      %p172 = scmp.eq.s32.totalorder %s30, 1
      %p173 = por %p171, %p172
      %p175 = scmp.ne.s32.totalorder %s160, %s174
      %p176 = scmp.eq.s32.totalorder %s30, 0
      %p177 = por %p175, %p176
      %s179 = sadd.s32 %s178, 1
      %p182 = scmp.eq.s32.totalorder %s24, 1
      %p183 = scmp.ne.s32.totalorder %s178, %s180
      %p184 = scmp.eq.s32.totalorder %s24, 0
      %p185 = por %p183, %p184
      %p186 = scmp.ne.s32.totalorder %s178, %s180
      %p187 = scmp.eq.s32.totalorder %s29, 1
      %p188 = por %p186, %p187
      %p189 = scmp.ne.s32.totalorder %s180, %s181
      %p190 = scmp.eq.s32.totalorder %s29, 0
      %p191 = por %p189, %p190
      %p192 = scmp.ne.s32.totalorder %s180, %s181
      %p193 = scmp.eq.s32.totalorder %s30, 1
      %p194 = por %p192, %p193
      %p196 = scmp.ne.s32.totalorder %s181, %s195
      %p197 = scmp.eq.s32.totalorder %s30, 0
      %p198 = por %p196, %p197
      %s200 = sadd.s32 %s199, 1
      %p203 = scmp.eq.s32.totalorder %s24, 1
      %p204 = scmp.ne.s32.totalorder %s199, %s201
      %p205 = scmp.eq.s32.totalorder %s24, 0
      %p206 = por %p204, %p205
      %p207 = scmp.ne.s32.totalorder %s199, %s201
      %p208 = scmp.eq.s32.totalorder %s29, 1
      %p209 = por %p207, %p208
      %p210 = scmp.ne.s32.totalorder %s201, %s202
      %p211 = scmp.eq.s32.totalorder %s29, 0
      %p212 = por %p210, %p211
      %p213 = scmp.ne.s32.totalorder %s201, %s202
      %p214 = scmp.eq.s32.totalorder %s30, 1
      %p215 = por %p213, %p214
      %p217 = scmp.ne.s32.totalorder %s202, %s216
      %p218 = scmp.eq.s32.totalorder %s30, 0
      %p219 = por %p217, %p218
      %s221 = sadd.s32 %s220, 1
      %p224 = scmp.eq.s32.totalorder %s24, 1
      %p225 = scmp.ne.s32.totalorder %s220, %s222
      %p226 = scmp.eq.s32.totalorder %s24, 0
      %p227 = por %p225, %p226
      %p228 = scmp.ne.s32.totalorder %s220, %s222
      %p229 = scmp.eq.s32.totalorder %s29, 1
      %p230 = por %p228, %p229
      %p231 = scmp.ne.s32.totalorder %s222, %s223
      %p232 = scmp.eq.s32.totalorder %s29, 0
      %p233 = por %p231, %p232
      %p234 = scmp.ne.s32.totalorder %s222, %s223
      %p235 = scmp.eq.s32.totalorder %s30, 1
      %p236 = por %p234, %p235
      %p238 = scmp.ne.s32.totalorder %s223, %s237
      %p239 = scmp.eq.s32.totalorder %s30, 0
      %p240 = por %p238, %p239
      %s241 = ssub.s32 %s31, %s50
      %s242 = ssub.s32 %s32, %s46
      %s243 = sor.u32 %s241, %s242
      %p244 = scmp.eq.s32.totalorder %s243, 0
      %s246 = sadd.s32 %s245, 1
      %s247 = scalar_select %p244, %s245, %s246
      %p250 = pneg %p244
      %p251 = scmp.eq.s32.totalorder %s24, 1
      %p252 = por %p250, %p251
      %p253 = scmp.ne.s32.totalorder %s245, %s248
      %p254 = scmp.eq.s32.totalorder %s24, 0
      %p255 = por %p253, %p254
      %p256 = scmp.ne.s32.totalorder %s245, %s248
      %p257 = scmp.eq.s32.totalorder %s29, 1
      %p258 = por %p256, %p257
      %p259 = scmp.ne.s32.totalorder %s248, %s249
      %p260 = scmp.eq.s32.totalorder %s29, 0
      %p261 = por %p259, %p260
      %p262 = scmp.ne.s32.totalorder %s248, %s249
      %p263 = scmp.eq.s32.totalorder %s30, 1
      %p264 = por %p262, %p263
      %p266 = scmp.ne.s32.totalorder %s249, %s265
      %p267 = scmp.eq.s32.totalorder %s30, 0
      %p268 = por %p266, %p267
      %p269 = scmp.le.s32.totalorder 1, %s24
      %p270 = scmp.lt.s32.totalorder %s24, 3
      %p271 = pnand %p269, %p270
      %p272 = pneg %p271
      // Predicated region
      $region9: #{tpu_custom_call.1} parent=5 // pred_check
        _
      $region10: #{tpu_custom_call.1} parent=5 // pred_check_branch
        %274 = sbr.rel (%p271) target = $region12
      $region11: #{tpu_custom_call.1} parent=5 // pred_region
        %s275 = ssub.s32 %s24, 1
        // Predicated region
        $region13: #{tpu_custom_call.1} parent=11 // pred_check
          %p276 = pneg %p128
        $region14: #{tpu_custom_call.1} parent=11 // pred_check_branch
          %278 = sbr.rel (%p276) target = $region16
        $region15: #{tpu_custom_call.1} parent=11 // pred_region
          %s280 = ssub.s32 512, 512
          %281 = vsyncadd [#allocation12], %s280
          %s282 = sshll.u32 [#allocation13], 4
          %s283 = int_to_ptr.vmem [resolvable:$true] %s282
          %288 = dma.hbm_to_vmem [thread:$0]  %s2, 512, %s283, [#allocation12], 128, 128, 8
        $region16: #{tpu_custom_call.1} parent=11 // pred_fallthru
          _
        // Predicated region
        $region17: #{tpu_custom_call.1} parent=11 // pred_check
          %p289 = pneg %p149
        $region18: #{tpu_custom_call.1} parent=11 // pred_check_branch
          %291 = sbr.rel (%p289) target = $region20
        $region19: #{tpu_custom_call.1} parent=11 // pred_region
          %s293 = ssub.s32 512, 512
          %294 = vsyncadd [#allocation15], %s293
          %s295 = sshll.u32 [#allocation14], 4
          %s296 = int_to_ptr.vmem [resolvable:$true] %s295
          %301 = dma.hbm_to_vmem [thread:$0]  %s3, 512, %s296, [#allocation15], 128, 128, 8
        $region20: #{tpu_custom_call.1} parent=11 // pred_fallthru
          _
        // Predicated region
        $region21: #{tpu_custom_call.1} parent=11 // pred_check
          %p302 = pneg %p170
        $region22: #{tpu_custom_call.1} parent=11 // pred_check_branch
          %304 = sbr.rel (%p302) target = $region24
        $region23: #{tpu_custom_call.1} parent=11 // pred_region
          %s306 = ssub.s32 512, 512
          %307 = vsyncadd [#allocation15], %s306
          %s308 = sshll.u32 [#allocation16], 4
          %s309 = int_to_ptr.vmem [resolvable:$true] %s308
          %314 = dma.hbm_to_vmem [thread:$0]  %s4, 512, %s309, [#allocation15], 128, 128, 8
        $region24: #{tpu_custom_call.1} parent=11 // pred_fallthru
          _
        // Predicated region
        $region25: #{tpu_custom_call.1} parent=11 // pred_check
          %p315 = pneg %p191
        $region26: #{tpu_custom_call.1} parent=11 // pred_check_branch
          %317 = sbr.rel (%p315) target = $region28
        $region27: #{tpu_custom_call.1} parent=11 // pred_region
          _
        $region28: #{tpu_custom_call.1} parent=11 // pred_fallthru
          _
        // Predicated region
        $region29: #{tpu_custom_call.1} parent=11 // pred_check
          %p318 = pneg %p212
        $region30: #{tpu_custom_call.1} parent=11 // pred_check_branch
          %320 = sbr.rel (%p318) target = $region32
        $region31: #{tpu_custom_call.1} parent=11 // pred_region
          _
        $region32: #{tpu_custom_call.1} parent=11 // pred_fallthru
          _
        // Predicated region
        $region33: #{tpu_custom_call.1} parent=11 // pred_check
          %p321 = pneg %p233
        $region34: #{tpu_custom_call.1} parent=11 // pred_check_branch
          %323 = sbr.rel (%p321) target = $region36
        $region35: #{tpu_custom_call.1} parent=11 // pred_region
          _
        $region36: #{tpu_custom_call.1} parent=11 // pred_fallthru
          _
      $region12: #{tpu_custom_call.1} parent=5 // pred_fallthru
        _
      %p324 = scmp.lt.s32.totalorder %s24, 2
      // Predicated region
      $region37: #{tpu_custom_call.1} parent=5 // pred_check
        %p325 = pneg %p324
      $region38: #{tpu_custom_call.1} parent=5 // pred_check_branch
        %327 = sbr.rel (%p325) target = $region40
      $region39: #{tpu_custom_call.1} parent=5 // pred_region
        // Predicated region
        $region41: #{tpu_custom_call.1} parent=39 // pred_check
          %p328 = pneg %p65
        $region42: #{tpu_custom_call.1} parent=39 // pred_check_branch
          %330 = sbr.rel (%p328) target = $region44
        $region43: #{tpu_custom_call.1} parent=39 // pred_region
          %s331 = sand.u32 %s55, 1
          %s332 = scalar_lea.sflag [#allocation9], %s331
          %s333 = sand.u32 %s55, 1
          %s334 = smul.addr %s333, 8
          %s335 = scalar_lea.vmem [#allocation8], %s334
          %s337 = ssub.s32 128, 128
          %338 = vsyncadd %s332, %s337
          %s339 = sadd.s32 %s32, %s31
          %s340 = smul.addr %s339, 128
          %s341 = scalar_lea.hbm %s0, %s340
          %s343 = sshll.u32 %s335, 4
          %s344 = int_to_ptr.vmem [resolvable:$true] %s343
          %346 = dma.hbm_to_vmem [thread:$0]  %s341, 128, %s344, %s332
        $region44: #{tpu_custom_call.1} parent=39 // pred_fallthru
          _
        // Predicated region
        $region45: #{tpu_custom_call.1} parent=39 // pred_check
          %p347 = pneg %p101
        $region46: #{tpu_custom_call.1} parent=39 // pred_check_branch
          %349 = sbr.rel (%p347) target = $region48
        $region47: #{tpu_custom_call.1} parent=39 // pred_region
          %s350 = sand.u32 %s24, 1
          %s351 = scalar_lea.sflag [#allocation12], %s350
          %s352 = sand.u32 %s91, 1
          %s353 = smul.addr %s352, 8
          %s354 = scalar_lea.vmem [#allocation11], %s353
          %p355 = scmp.lt.s32.totalorder %s32, 1
          %s356 = scalar_select %p355, %s32, 1
          %s357 = ssub.s32 1, %s356
          %s358 = smul.u32 %s33, %s357
          %s360 = ssub.s32 128, 128
          %361 = vsyncadd %s351, %s360
          %s362 = sadd.s32 %s358, %s31
          %s363 = smul.addr %s362, 128
          %s364 = scalar_lea.hbm %s1, %s363
          %s366 = sshll.u32 %s354, 4
          %s367 = int_to_ptr.vmem [resolvable:$true] %s366
          %369 = dma.hbm_to_vmem [thread:$0]  %s364, 128, %s367, %s351
        $region48: #{tpu_custom_call.1} parent=39 // pred_fallthru
          _
      $region40: #{tpu_custom_call.1} parent=5 // pred_fallthru
        _
      %p370 = scmp.le.s32.totalorder 1, %s24
      %p371 = scmp.lt.s32.totalorder %s24, 3
      %p372 = pnand %p370, %p371
      %p373 = pneg %p372
      // Predicated region
      $region49: #{tpu_custom_call.1} parent=5 // pred_check
        _
      $region50: #{tpu_custom_call.1} parent=5 // pred_check_branch
        %375 = sbr.rel (%p372) target = $region52
      $region51: #{tpu_custom_call.1} parent=5 // pred_region
        %s376 = ssub.s32 %s24, 1
        %s377 = sand.u32 %s58, 1
        %s378 = scalar_lea.sflag [#allocation9], %s377
        %s379 = sand.u32 %s58, 1
        %s380 = smul.addr %s379, 8
        %s381 = scalar_lea.vmem [#allocation8], %s380
        // Predicated region
        $region53: #{tpu_custom_call.1} parent=51 // pred_check
          %p382 = pneg %p71
        $region54: #{tpu_custom_call.1} parent=51 // pred_check_branch
          %384 = sbr.rel (%p382) target = $region56
        $region55: #{tpu_custom_call.1} parent=51 // pred_region
          %385 = dma.done %s378, 128
        $region56: #{tpu_custom_call.1} parent=51 // pred_fallthru
          _
        %s386 = sand.u32 %s29, 1
        %s387 = scalar_lea.sflag [#allocation12], %s386
        %s388 = sand.u32 %s94, 1
        %s389 = smul.addr %s388, 8
        %s390 = scalar_lea.vmem [#allocation11], %s389
        // Predicated region
        $region57: #{tpu_custom_call.1} parent=51 // pred_check
          %p391 = pneg %p107
        $region58: #{tpu_custom_call.1} parent=51 // pred_check_branch
          %393 = sbr.rel (%p391) target = $region60
        $region59: #{tpu_custom_call.1} parent=51 // pred_region
          %394 = dma.done %s387, 128
        $region60: #{tpu_custom_call.1} parent=51 // pred_fallthru
          _
        // Predicated region
        $region61: #{tpu_custom_call.1} parent=51 // pred_check
          %p395 = pneg %p128
        $region62: #{tpu_custom_call.1} parent=51 // pred_check_branch
          %397 = sbr.rel (%p395) target = $region64
        $region63: #{tpu_custom_call.1} parent=51 // pred_region
          %398 = dma.done [#allocation12], 512
        $region64: #{tpu_custom_call.1} parent=51 // pred_fallthru
          _
        // Predicated region
        $region65: #{tpu_custom_call.1} parent=51 // pred_check
          %p399 = pneg %p149
        $region66: #{tpu_custom_call.1} parent=51 // pred_check_branch
          %401 = sbr.rel (%p399) target = $region68
        $region67: #{tpu_custom_call.1} parent=51 // pred_region
          %402 = dma.done [#allocation15], 512
        $region68: #{tpu_custom_call.1} parent=51 // pred_fallthru
          _
        // Predicated region
        $region69: #{tpu_custom_call.1} parent=51 // pred_check
          %p403 = pneg %p170
        $region70: #{tpu_custom_call.1} parent=51 // pred_check_branch
          %405 = sbr.rel (%p403) target = $region72
        $region71: #{tpu_custom_call.1} parent=51 // pred_region
          %406 = dma.done [#allocation15], 512
        $region72: #{tpu_custom_call.1} parent=51 // pred_fallthru
          _
        %s407 = sand.u32 %s58, 1
        %s408 = scalar_lea.sflag [#allocation9], %s407
        %s409 = sand.u32 %s58, 1
        %s410 = smul.addr %s409, 8
        %s411 = scalar_lea.vmem [#allocation8], %s410
        %p412 = pneg %p71
        %p413 = pneg %p68
        %s414 = sand.u32 %s29, 1
        %s415 = scalar_lea.sflag [#allocation12], %s414
        %s416 = sand.u32 %s94, 1
        %s417 = smul.addr %s416, 8
        %s418 = scalar_lea.vmem [#allocation11], %s417
        %p419 = pneg %p107
        %p420 = pneg %p104
        %p421 = pneg %p128
        %p422 = pneg %p125
        %p423 = pneg %p149
        %p424 = pneg %p146
        %p425 = pneg %p170
        %p426 = pneg %p167
        %p427 = pneg %p191
        %p428 = pneg %p188
        %p429 = pneg %p212
        %p430 = pneg %p209
        %p431 = pneg %p233
        %p432 = pneg %p230
        %p433 = pneg %p261
        %p434 = pneg %p258
        %s435 = sand.u32 %s248, 1
        %s436 = scalar_lea.sflag [#allocation10], %s435
        %s437 = sand.u32 %s248, 1
        %s438 = smul.addr %s437, 8
        %s439 = scalar_lea.vmem [#allocation17], %s438
        %p440 = scmp.lt.s32.totalorder %s35, 1
        %s441 = scalar_select %p440, %s35, 1
        %s442 = ssub.s32 1, %s441
        %s443 = smul.u32 %s36, %s442
        %s444 = smul.u32 %s36, 8
        %p445 = scmp.eq.s32.totalorder %s35, 0
        // Predicated region
        $region73: #{tpu_custom_call.1} parent=51 // pred_check
          %p446 = pneg %p445
        $region74: #{tpu_custom_call.1} parent=51 // pred_check_branch
          %448 = sbr.rel (%p446) target = $region76
        $region75: #{tpu_custom_call.1} parent=51 // pred_region
          %v449 = vld [vmem:[%s390] sm:$0xff]
          %v450 = vld [vmem:[#allocation14] sm:$0xff]
          %v451 = vld [vmem:[#allocation14 + $0x8] sm:$0xff]
          %v452 = vld [vmem:[#allocation14 + $0x10] sm:$0xff]
          %v453 = vld [vmem:[#allocation14 + $0x18] sm:$0xff]
          %v454 = vld [vmem:[%s6] sm:$0x1]
          %v456 = vlaneseq
          %v457 = vshrl.u32 %v456, 7
          %v458 = vsub.s32 0, %v457
          %v459 = vrot.slane %v454, %v458
          %vm461 = vcmask 261120
          %v463 = vsel %vm461, %v449, 0
          %465 = vmatprep.subr.mxu0 0.0
          %466 = vmatpush1.msra.mxu0 0.0
          %467 = vmatprep.subr.mxu0 0.0
          %468 = vmatpush1.msra.mxu0 0.0
          %469 = vmatprep.subr.mxu0 0.0
          %470 = vmatpush1.msra.mxu0 0.0
          %471 = vmatprep.subr.mxu0 0.0
          %472 = vmatpush1.msra.mxu0 0.0
          %473 = vmatprep.subr.mxu0 0.0
          %474 = vmatpush1.msra.mxu0 0.0
          %475 = vmatprep.subr.mxu0 0.0
          %476 = vmatpush1.msra.mxu0 0.0
          %477 = vmatprep.subr.mxu0 0.0
          %478 = vmatpush1.msra.mxu0 0.0
          %479 = vmatprep.subr.mxu0 0.0
          %480 = vmatpush1.msra.mxu0 0.0
          %481 = vmatprep.subr.mxu0 0.0
          %482 = vmatpush1.msra.mxu0 0.0
          %483 = vmatprep.subr.mxu0 0.0
          %484 = vmatpush1.msra.mxu0 0.0
          %485 = vmatprep.subr.mxu0 0.0
          %486 = vmatpush1.msra.mxu0 0.0
          %487 = vmatprep.subr.mxu0 0.0
          %488 = vmatpush1.msra.mxu0 0.0
          %489 = vmatprep.subr.mxu0 0.0
          %490 = vmatpush1.msra.mxu0 %v453
          %491 = vmatprep.subr.mxu0 0.0
          %492 = vmatpush1.msra.mxu0 %v452
          %493 = vmatprep.subr.mxu0 0.0
          %494 = vmatpush1.msra.mxu0 %v451
          %495 = vmatprep.subr.mxu0 0.0
          %496 = vmatpush1.msra.mxu0 %v450
          %497 = vmatprep.subr.mxu0 0.0
          %498 = vmatpush2.msra.mxu0 0.0
          %499 = vmatprep.subr.mxu0 0.0
          %500 = vmatpush2.msra.mxu0 0.0
          %501 = vmatprep.subr.mxu0 0.0
          %502 = vmatpush2.msra.mxu0 0.0
          %503 = vmatprep.subr.mxu0 0.0
          %504 = vmatpush2.msra.mxu0 0.0
          %505 = vmatprep.subr.mxu0 0.0
          %506 = vmatpush2.msra.mxu0 0.0
          %507 = vmatprep.subr.mxu0 0.0
          %508 = vmatpush2.msra.mxu0 0.0
          %509 = vmatprep.subr.mxu0 0.0
          %510 = vmatpush2.msra.mxu0 0.0
          %511 = vmatprep.subr.mxu0 0.0
          %512 = vmatpush2.msra.mxu0 0.0
          %513 = vmatprep.subr.mxu0 0.0
          %514 = vmatpush2.msra.mxu0 0.0
          %515 = vmatprep.subr.mxu0 0.0
          %516 = vmatpush2.msra.mxu0 0.0
          %517 = vmatprep.subr.mxu0 0.0
          %518 = vmatpush2.msra.mxu0 0.0
          %519 = vmatprep.subr.mxu0 0.0
          %520 = vmatpush2.msra.mxu0 0.0
          %521 = vmatprep.subr.mxu0 0.0
          %522 = vmatpush2.msra.mxu0 0.0
          %523 = vmatprep.subr.mxu0 0.0
          %524 = vmatpush2.msra.mxu0 0.0
          %525 = vmatprep.subr.mxu0 0.0
          %526 = vmatpush2.msra.mxu0 0.0
          %527 = vmatprep.subr.mxu0 0.0
          %528 = vmatpush2.msra.mxu0 0.0
          %529 = vmatprep.mubr.f32.mxu0 0.0
          %530 = vmatmul.mubr.f32.gmra.mxu0 %v463
          %v531 = vpop.f32.mrf.mxu0
          %v532 = vadd.f32 %v459, %v531
          %v533 = vpop.f32.mrf.mxu0
          %534 = vdwg.mxu0
          %v535 = vld [vmem:[#allocation16] sm:$0xff]
          %v536 = vld [vmem:[#allocation16 + $0x8] sm:$0xff]
          %v537 = vld [vmem:[#allocation16 + $0x10] sm:$0xff]
          %v538 = vld [vmem:[#allocation16 + $0x18] sm:$0xff]
          %v539 = vld [vmem:[%s7] sm:$0x1]
          %v541 = vlaneseq
          %v542 = vshrl.u32 %v541, 7
          %v543 = vsub.s32 0, %v542
          %v544 = vrot.slane %v539, %v543
          %546 = vmatprep.subr.mxu0 0.0
          %547 = vmatpush1.msra.mxu0 0.0
          %548 = vmatprep.subr.mxu0 0.0
          %549 = vmatpush1.msra.mxu0 0.0
          %550 = vmatprep.subr.mxu0 0.0
          %551 = vmatpush1.msra.mxu0 0.0
          %552 = vmatprep.subr.mxu0 0.0
          %553 = vmatpush1.msra.mxu0 0.0
          %554 = vmatprep.subr.mxu0 0.0
          %555 = vmatpush1.msra.mxu0 0.0
          %556 = vmatprep.subr.mxu0 0.0
          %557 = vmatpush1.msra.mxu0 0.0
          %558 = vmatprep.subr.mxu0 0.0
          %559 = vmatpush1.msra.mxu0 0.0
          %560 = vmatprep.subr.mxu0 0.0
          %561 = vmatpush1.msra.mxu0 0.0
          %562 = vmatprep.subr.mxu0 0.0
          %563 = vmatpush1.msra.mxu0 0.0
          %564 = vmatprep.subr.mxu0 0.0
          %565 = vmatpush1.msra.mxu0 0.0
          %566 = vmatprep.subr.mxu0 0.0
          %567 = vmatpush1.msra.mxu0 0.0
          %568 = vmatprep.subr.mxu0 0.0
          %569 = vmatpush1.msra.mxu0 0.0
          %570 = vmatprep.subr.mxu0 0.0
          %571 = vmatpush1.msra.mxu0 %v538
          %572 = vmatprep.subr.mxu0 0.0
          %573 = vmatpush1.msra.mxu0 %v537
          %574 = vmatprep.subr.mxu0 0.0
          %575 = vmatpush1.msra.mxu0 %v536
          %576 = vmatprep.subr.mxu0 0.0
          %577 = vmatpush1.msra.mxu0 %v535
          %578 = vmatprep.subr.mxu0 0.0
          %579 = vmatpush2.msra.mxu0 0.0
          %580 = vmatprep.subr.mxu0 0.0
          %581 = vmatpush2.msra.mxu0 0.0
          %582 = vmatprep.subr.mxu0 0.0
          %583 = vmatpush2.msra.mxu0 0.0
          %584 = vmatprep.subr.mxu0 0.0
          %585 = vmatpush2.msra.mxu0 0.0
          %586 = vmatprep.subr.mxu0 0.0
          %587 = vmatpush2.msra.mxu0 0.0
          %588 = vmatprep.subr.mxu0 0.0
          %589 = vmatpush2.msra.mxu0 0.0
          %590 = vmatprep.subr.mxu0 0.0
          %591 = vmatpush2.msra.mxu0 0.0
          %592 = vmatprep.subr.mxu0 0.0
          %593 = vmatpush2.msra.mxu0 0.0
          %594 = vmatprep.subr.mxu0 0.0
          %595 = vmatpush2.msra.mxu0 0.0
          %596 = vmatprep.subr.mxu0 0.0
          %597 = vmatpush2.msra.mxu0 0.0
          %598 = vmatprep.subr.mxu0 0.0
          %599 = vmatpush2.msra.mxu0 0.0
          %600 = vmatprep.subr.mxu0 0.0
          %601 = vmatpush2.msra.mxu0 0.0
          %602 = vmatprep.subr.mxu0 0.0
          %603 = vmatpush2.msra.mxu0 0.0
          %604 = vmatprep.subr.mxu0 0.0
          %605 = vmatpush2.msra.mxu0 0.0
          %606 = vmatprep.subr.mxu0 0.0
          %607 = vmatpush2.msra.mxu0 0.0
          %608 = vmatprep.subr.mxu0 0.0
          %609 = vmatpush2.msra.mxu0 0.0
          %610 = vmatprep.mubr.f32.mxu0 0.0
          %611 = vmatmul.mubr.f32.gmra.mxu0 %v463
          %v612 = vpop.f32.mrf.mxu0
          %v613 = vadd.f32 %v544, %v612
          %v614 = vpop.f32.mrf.mxu0
          %615 = vdwg.mxu0
          %s616 = scalar_lea.vmem [#allocation3], %s444
          %617 = vst.msk [vmem:[%s616] sm:$0xff] %vm461, %v532
          %s618 = scalar_lea.vmem [#allocation4], %s444
          %619 = vst.msk [vmem:[%s618] sm:$0xff] %vm461, %v613
        $region76: #{tpu_custom_call.1} parent=51 // pred_fallthru
          _
        %p620 = scmp.eq.s32.totalorder %s36, 0
        // Predicated region
        $region77: #{tpu_custom_call.1} parent=51 // pred_check
          %p621 = pneg %p620
        $region78: #{tpu_custom_call.1} parent=51 // pred_check_branch
          %623 = sbr.rel (%p621) target = $region80
        $region79: #{tpu_custom_call.1} parent=51 // pred_region
          %v624 = vld [vmem:[%s381] sm:$0xff]
          %v625 = vld [vmem:[#allocation13] sm:$0xff]
          %v626 = vld [vmem:[#allocation13 + $0x8] sm:$0xff]
          %v627 = vld [vmem:[#allocation13 + $0x10] sm:$0xff]
          %v628 = vld [vmem:[#allocation13 + $0x18] sm:$0xff]
          %v629 = vld [vmem:[%s5] sm:$0x1]
          %v631 = vlaneseq
          %v632 = vshrl.u32 %v631, 7
          %v633 = vsub.s32 0, %v632
          %v634 = vrot.slane %v629, %v633
          %vm636 = vcmask 261120
          %v638 = vsel %vm636, %v624, 0
          %640 = vmatprep.subr.mxu0 0.0
          %641 = vmatpush1.msra.mxu0 0.0
          %642 = vmatprep.subr.mxu0 0.0
          %643 = vmatpush1.msra.mxu0 0.0
          %644 = vmatprep.subr.mxu0 0.0
          %645 = vmatpush1.msra.mxu0 0.0
          %646 = vmatprep.subr.mxu0 0.0
          %647 = vmatpush1.msra.mxu0 0.0
          %648 = vmatprep.subr.mxu0 0.0
          %649 = vmatpush1.msra.mxu0 0.0
          %650 = vmatprep.subr.mxu0 0.0
          %651 = vmatpush1.msra.mxu0 0.0
          %652 = vmatprep.subr.mxu0 0.0
          %653 = vmatpush1.msra.mxu0 0.0
          %654 = vmatprep.subr.mxu0 0.0
          %655 = vmatpush1.msra.mxu0 0.0
          %656 = vmatprep.subr.mxu0 0.0
          %657 = vmatpush1.msra.mxu0 0.0
          %658 = vmatprep.subr.mxu0 0.0
          %659 = vmatpush1.msra.mxu0 0.0
          %660 = vmatprep.subr.mxu0 0.0
          %661 = vmatpush1.msra.mxu0 0.0
          %662 = vmatprep.subr.mxu0 0.0
          %663 = vmatpush1.msra.mxu0 0.0
          %664 = vmatprep.subr.mxu0 0.0
          %665 = vmatpush1.msra.mxu0 %v628
          %666 = vmatprep.subr.mxu0 0.0
          %667 = vmatpush1.msra.mxu0 %v627
          %668 = vmatprep.subr.mxu0 0.0
          %669 = vmatpush1.msra.mxu0 %v626
          %670 = vmatprep.subr.mxu0 0.0
          %671 = vmatpush1.msra.mxu0 %v625
          %672 = vmatprep.subr.mxu0 0.0
          %673 = vmatpush2.msra.mxu0 0.0
          %674 = vmatprep.subr.mxu0 0.0
          %675 = vmatpush2.msra.mxu0 0.0
          %676 = vmatprep.subr.mxu0 0.0
          %677 = vmatpush2.msra.mxu0 0.0
          %678 = vmatprep.subr.mxu0 0.0
          %679 = vmatpush2.msra.mxu0 0.0
          %680 = vmatprep.subr.mxu0 0.0
          %681 = vmatpush2.msra.mxu0 0.0
          %682 = vmatprep.subr.mxu0 0.0
          %683 = vmatpush2.msra.mxu0 0.0
          %684 = vmatprep.subr.mxu0 0.0
          %685 = vmatpush2.msra.mxu0 0.0
          %686 = vmatprep.subr.mxu0 0.0
          %687 = vmatpush2.msra.mxu0 0.0
          %688 = vmatprep.subr.mxu0 0.0
          %689 = vmatpush2.msra.mxu0 0.0
          %690 = vmatprep.subr.mxu0 0.0
          %691 = vmatpush2.msra.mxu0 0.0
          %692 = vmatprep.subr.mxu0 0.0
          %693 = vmatpush2.msra.mxu0 0.0
          %694 = vmatprep.subr.mxu0 0.0
          %695 = vmatpush2.msra.mxu0 0.0
          %696 = vmatprep.subr.mxu0 0.0
          %697 = vmatpush2.msra.mxu0 0.0
          %698 = vmatprep.subr.mxu0 0.0
          %699 = vmatpush2.msra.mxu0 0.0
          %700 = vmatprep.subr.mxu0 0.0
          %701 = vmatpush2.msra.mxu0 0.0
          %702 = vmatprep.subr.mxu0 0.0
          %703 = vmatpush2.msra.mxu0 0.0
          %704 = vmatprep.mubr.f32.mxu0 0.0
          %705 = vmatmul.mubr.f32.gmra.mxu0 %v638
          %v706 = vpop.f32.mrf.mxu0
          %v707 = vadd.f32 %v634, %v706
          %v708 = vpop.f32.mrf.mxu0
          %709 = vdwg.mxu0
          %v710 = vmul.f32 %v707, 0.17677669
          %711 = vst.msk [vmem:[#allocation2] sm:$0xff] %vm636, %v710
          %vm712 = vcmask 7168
          %713 = vst.msk [vmem:[#allocation5] sm:$0xff] %vm712, -inf
          %714 = vst.msk [vmem:[#allocation6] sm:$0xff] %vm712, 0.0
          %715 = vst.msk [vmem:[#allocation7] sm:$0xff] %vm636, 0.0
        $region80: #{tpu_custom_call.1} parent=51 // pred_fallthru
          _
        %s716 = scalar_lea.vmem [#allocation3], %s444
        %v717 = vld [vmem:[%s716] sm:$0xff]
        %s718 = scalar_lea.vmem [#allocation4], %s444
        %v719 = vld [vmem:[%s718] sm:$0xff]
        %v720 = vld [vmem:[#allocation2] sm:$0xff]
        %vm721 = vcmask 261120
        %v723 = vsel %vm721, %v720, 0
        %v726 = vsel %vm721, %v717, 0
        %728 = vmatprep.subr.mxu0 0.0
        %729 = vmatpush1.xpose.msra.mxu0 0.0
        %730 = vmatprep.subr.mxu0 0.0
        %731 = vmatpush1.xpose.msra.mxu0 0.0
        %732 = vmatprep.subr.mxu0 0.0
        %733 = vmatpush1.xpose.msra.mxu0 0.0
        %734 = vmatprep.subr.mxu0 0.0
        %735 = vmatpush1.xpose.msra.mxu0 0.0
        %736 = vmatprep.subr.mxu0 0.0
        %737 = vmatpush1.xpose.msra.mxu0 0.0
        %738 = vmatprep.subr.mxu0 0.0
        %739 = vmatpush1.xpose.msra.mxu0 0.0
        %740 = vmatprep.subr.mxu0 0.0
        %741 = vmatpush1.xpose.msra.mxu0 0.0
        %742 = vmatprep.subr.mxu0 0.0
        %743 = vmatpush1.xpose.msra.mxu0 0.0
        %744 = vmatprep.subr.mxu0 0.0
        %745 = vmatpush1.xpose.msra.mxu0 0.0
        %746 = vmatprep.subr.mxu0 0.0
        %747 = vmatpush1.xpose.msra.mxu0 0.0
        %748 = vmatprep.subr.mxu0 0.0
        %749 = vmatpush1.xpose.msra.mxu0 0.0
        %750 = vmatprep.subr.mxu0 0.0
        %751 = vmatpush1.xpose.msra.mxu0 0.0
        %752 = vmatprep.subr.mxu0 0.0
        %753 = vmatpush1.xpose.msra.mxu0 0.0
        %754 = vmatprep.subr.mxu0 0.0
        %755 = vmatpush1.xpose.msra.mxu0 0.0
        %756 = vmatprep.subr.mxu0 0.0
        %757 = vmatpush1.xpose.msra.mxu0 0.0
        %758 = vmatprep.subr.mxu0 0.0
        %759 = vmatpush1.xpose.msra.mxu0 %v726
        %760 = vmatprep.subr.mxu0 0.0
        %761 = vmatpush2.xpose.msra.mxu0 0.0
        %762 = vmatprep.subr.mxu0 0.0
        %763 = vmatpush2.xpose.msra.mxu0 0.0
        %764 = vmatprep.subr.mxu0 0.0
        %765 = vmatpush2.xpose.msra.mxu0 0.0
        %766 = vmatprep.subr.mxu0 0.0
        %767 = vmatpush2.xpose.msra.mxu0 0.0
        %768 = vmatprep.subr.mxu0 0.0
        %769 = vmatpush2.xpose.msra.mxu0 0.0
        %770 = vmatprep.subr.mxu0 0.0
        %771 = vmatpush2.xpose.msra.mxu0 0.0
        %772 = vmatprep.subr.mxu0 0.0
        %773 = vmatpush2.xpose.msra.mxu0 0.0
        %774 = vmatprep.subr.mxu0 0.0
        %775 = vmatpush2.xpose.msra.mxu0 0.0
        %776 = vmatprep.subr.mxu0 0.0
        %777 = vmatpush2.xpose.msra.mxu0 0.0
        %778 = vmatprep.subr.mxu0 0.0
        %779 = vmatpush2.xpose.msra.mxu0 0.0
        %780 = vmatprep.subr.mxu0 0.0
        %781 = vmatpush2.xpose.msra.mxu0 0.0
        %782 = vmatprep.subr.mxu0 0.0
        %783 = vmatpush2.xpose.msra.mxu0 0.0
        %784 = vmatprep.subr.mxu0 0.0
        %785 = vmatpush2.xpose.msra.mxu0 0.0
        %786 = vmatprep.subr.mxu0 0.0
        %787 = vmatpush2.xpose.msra.mxu0 0.0
        %788 = vmatprep.subr.mxu0 0.0
        %789 = vmatpush2.xpose.msra.mxu0 0.0
        %790 = vmatprep.subr.mxu0 0.0
        %791 = vmatpush2.xpose.msra.mxu0 0.0
        %792 = vmatprep.mubr.f32.mxu0 0.0
        %793 = vmatmul.mubr.f32.gmra.mxu0 %v723
        %v794 = vpop.f32.mrf.mxu0
        %v795 = vadd.f32 0.0, %v794
        %v796 = vpop.f32.mrf.mxu0
        %797 = vdwg.mxu0
        %v798 = vld [vmem:[#allocation5] sm:$0xff]
        %vm799 = vcmask 64512
        %v800 = vsel %vm799, %v795, -inf
        %801 = vmax.xlane.f32.xlu0 %v800
        %v802 = vpop.xlane.xlu0 %801
        %v803 = vmax.f32 %v798, %v802
        %v804 = vsub.f32 %v798, %v803
        %v805 = vmul.f32 %v804, 1.442695
        %v806 = vpow.pop %v805
        %808 = vset.pattern.permute.xlu0 0
        %809 = vperm.xlu0 %808, %v803
        %v810 = vpop.permute.xlu0 %809
        %v812 = vsub.f32 %v795, %v810
        %v813 = vmul.f32 %v812, 1.442695
        %v814 = vpow.pop %v813
        %v815 = vld [vmem:[#allocation6] sm:$0xff]
        %v816 = vmul.f32 %v806, %v815
        %v817 = vsel %vm799, %v814, 0.0
        %818 = vadd.xlane.f32.xlu0 %v817
        %v819 = vpop.xlane.xlu0 %818
        %v820 = vadd.f32 %v816, %v819
        %vm821 = vcmask 7168
        %822 = vst.msk [vmem:[#allocation6] sm:$0xff] %vm821, %v820
        %v823 = vld [vmem:[#allocation7] sm:$0xff]
        %825 = vset.pattern.permute.xlu0 0
        %826 = vperm.xlu0 %825, %v806
        %v827 = vpop.permute.xlu0 %826
        %v829 = vmul.f32 %v827, %v823
        %v831 = vsel %vm799, %v814, 0
        %833 = vmatprep.subr.mxu0 0.0
        %834 = vmatpush1.msra.mxu0 0.0
        %835 = vmatprep.subr.mxu0 0.0
        %836 = vmatpush1.msra.mxu0 0.0
        %837 = vmatprep.subr.mxu0 0.0
        %838 = vmatpush1.msra.mxu0 0.0
        %839 = vmatprep.subr.mxu0 0.0
        %840 = vmatpush1.msra.mxu0 0.0
        %841 = vmatprep.subr.mxu0 0.0
        %842 = vmatpush1.msra.mxu0 0.0
        %843 = vmatprep.subr.mxu0 0.0
        %844 = vmatpush1.msra.mxu0 0.0
        %845 = vmatprep.subr.mxu0 0.0
        %846 = vmatpush1.msra.mxu0 0.0
        %847 = vmatprep.subr.mxu0 0.0
        %848 = vmatpush1.msra.mxu0 0.0
        %849 = vmatprep.subr.mxu0 0.0
        %850 = vmatpush1.msra.mxu0 0.0
        %851 = vmatprep.subr.mxu0 0.0
        %852 = vmatpush1.msra.mxu0 0.0
        %853 = vmatprep.subr.mxu0 0.0
        %854 = vmatpush1.msra.mxu0 0.0
        %855 = vmatprep.subr.mxu0 0.0
        %856 = vmatpush1.msra.mxu0 0.0
        %857 = vmatprep.subr.mxu0 0.0
        %858 = vmatpush1.msra.mxu0 0.0
        %859 = vmatprep.subr.mxu0 0.0
        %860 = vmatpush1.msra.mxu0 0.0
        %861 = vmatprep.subr.mxu0 0.0
        %862 = vmatpush1.msra.mxu0 0.0
        %863 = vmatprep.subr.mxu0 0.0
        %864 = vmatpush1.msra.mxu0 %v719
        %865 = vmatprep.subr.mxu0 0.0
        %866 = vmatpush2.msra.mxu0 0.0
        %867 = vmatprep.subr.mxu0 0.0
        %868 = vmatpush2.msra.mxu0 0.0
        %869 = vmatprep.subr.mxu0 0.0
        %870 = vmatpush2.msra.mxu0 0.0
        %871 = vmatprep.subr.mxu0 0.0
        %872 = vmatpush2.msra.mxu0 0.0
        %873 = vmatprep.subr.mxu0 0.0
        %874 = vmatpush2.msra.mxu0 0.0
        %875 = vmatprep.subr.mxu0 0.0
        %876 = vmatpush2.msra.mxu0 0.0
        %877 = vmatprep.subr.mxu0 0.0
        %878 = vmatpush2.msra.mxu0 0.0
        %879 = vmatprep.subr.mxu0 0.0
        %880 = vmatpush2.msra.mxu0 0.0
        %881 = vmatprep.subr.mxu0 0.0
        %882 = vmatpush2.msra.mxu0 0.0
        %883 = vmatprep.subr.mxu0 0.0
        %884 = vmatpush2.msra.mxu0 0.0
        %885 = vmatprep.subr.mxu0 0.0
        %886 = vmatpush2.msra.mxu0 0.0
        %887 = vmatprep.subr.mxu0 0.0
        %888 = vmatpush2.msra.mxu0 0.0
        %889 = vmatprep.subr.mxu0 0.0
        %890 = vmatpush2.msra.mxu0 0.0
        %891 = vmatprep.subr.mxu0 0.0
        %892 = vmatpush2.msra.mxu0 0.0
        %893 = vmatprep.subr.mxu0 0.0
        %894 = vmatpush2.msra.mxu0 0.0
        %895 = vmatprep.subr.mxu0 0.0
        %896 = vmatpush2.msra.mxu0 0.0
        %897 = vmatprep.mubr.f32.mxu0 0.0
        %898 = vmatmul.mubr.f32.gmra.mxu0 %v831
        %v899 = vpop.f32.mrf.mxu0
        %v900 = vadd.f32 0.0, %v899
        %v901 = vpop.f32.mrf.mxu0
        %902 = vdwg.mxu0
        %v903 = vadd.f32 %v829, %v900
        %904 = vst.msk [vmem:[#allocation7] sm:$0xff] %vm721, %v903
        %905 = vst.msk [vmem:[#allocation5] sm:$0xff] %vm821, %v803
        // Predicated region
        $region81: #{tpu_custom_call.1} parent=51 // pred_check
          %p906 = pneg %p620
        $region82: #{tpu_custom_call.1} parent=51 // pred_check_branch
          %908 = sbr.rel (%p906) target = $region84
        $region83: #{tpu_custom_call.1} parent=51 // pred_region
          %v909 = vld [vmem:[#allocation6] sm:$0xff]
          %v910 = vrcp.pop %v909
          %v911 = vld [vmem:[#allocation7] sm:$0xff]
          %913 = vset.pattern.permute.xlu0 0
          %914 = vperm.xlu0 %913, %v910
          %v915 = vpop.permute.xlu0 %914
          %v917 = vmul.f32 %v911, %v915
          %918 = vst.msk [vmem:[%s439] sm:$0xff] %vm721, %v917
        $region84: #{tpu_custom_call.1} parent=51 // pred_fallthru
          _
        %s919 = sand.u32 %s248, 1
        %s920 = scalar_lea.sflag [#allocation10], %s919
        %s921 = sand.u32 %s248, 1
        %s922 = smul.addr %s921, 8
        %s923 = scalar_lea.vmem [#allocation17], %s922
        // Predicated region
        $region85: #{tpu_custom_call.1} parent=51 // pred_check
          %p924 = pneg %p258
        $region86: #{tpu_custom_call.1} parent=51 // pred_check_branch
          %926 = sbr.rel (%p924) target = $region88
        $region87: #{tpu_custom_call.1} parent=51 // pred_region
          %s928 = ssub.s32 128, 128
          %929 = vsyncadd %s920, %s928
          %s930 = sadd.s32 %s35, %s34
          %s931 = smul.addr %s930, 128
          %s932 = scalar_lea.hbm %s8, %s931
          %s934 = sshll.u32 %s923, 4
          %s935 = int_to_ptr.vmem [resolvable:$true] %s934
          %937 = dma.vmem_to_hbm [thread:$0]  %s935, 128, %s932, %s920
        $region88: #{tpu_custom_call.1} parent=51 // pred_fallthru
          _
      $region52: #{tpu_custom_call.1} parent=5 // pred_fallthru
        _
      %p938 = scmp.le.s32.totalorder 2, %s24
      // Predicated region
      $region89: #{tpu_custom_call.1} parent=5 // pred_check
        %p939 = pneg %p938
      $region90: #{tpu_custom_call.1} parent=5 // pred_check_branch
        %941 = sbr.rel (%p939) target = $region92
      $region91: #{tpu_custom_call.1} parent=5 // pred_region
        %s942 = ssub.s32 %s24, 2
        // Predicated region
        $region93: #{tpu_custom_call.1} parent=91 // pred_check
          %p943 = pneg %p264
        $region94: #{tpu_custom_call.1} parent=91 // pred_check_branch
          %945 = sbr.rel (%p943) target = $region96
        $region95: #{tpu_custom_call.1} parent=91 // pred_region
          %s946 = sand.u32 %s249, 1
          %s947 = scalar_lea.sflag [#allocation10], %s946
          %s948 = sand.u32 %s249, 1
          %s949 = smul.addr %s948, 8
          %s950 = scalar_lea.vmem [#allocation17], %s949
          %951 = dma.done %s947, 128
        $region96: #{tpu_custom_call.1} parent=91 // pred_fallthru
          _
      $region92: #{tpu_custom_call.1} parent=5 // pred_fallthru
        _
    $region6: #{tpu_custom_call.1} parent=1 // loop_footer
      %s28 = sadd.s32 1, %s24
    $region7: #{tpu_custom_call.1} parent=1 // loop_footer_branch
      %23 = sbr.rel target = $region3
    $region8: #{tpu_custom_call.1} parent=1 // loop_exit
      _
    %952 = vsyncpa [#allocation9], 1
    %s953 = scalar_lea.sflag [#allocation9], 1
    %954 = vsyncpa %s953, 1
    %955 = vsyncpa [#allocation12], 1
    %s956 = scalar_lea.sflag [#allocation12], 1
    %957 = vsyncpa %s956, 1
    %958 = vsyncpa [#allocation15], 1
    %959 = vsyncpa [#allocation10], 1
    %s960 = scalar_lea.sflag [#allocation10], 1
    %961 = vsyncpa %s960, 1

</llo_original>
